<compile_context>
chip_gen: v6e
topology: v6e:2x2x1
jax: 0.10.0
libtpu: 0.0.40
codegen_flags: <defaults>
</compile_context>

<pallas_src>
import functools

import jax
import jax.numpy as jnp
from jax.experimental import pallas as pl
from jax.experimental.pallas import tpu as pltpu


def attention_pool_kernel(x_ref, w1_ref, b1_ref, w2_ref, b2_ref,
                          pooled_ref, a_ref,
                          m_sc, l_sc, acc_sc, *, n_valid):
    # x_ref:      (TB, TN, C)  activation tile (bf16 or f32)
    # w1_ref:     (C, H)       (same dtype as x)     b1_ref: (1, H) f32
    # w2_ref:     (1, H) f32   second Linear's weight stored as a row
    # b2_ref:     (1,) SMEM    second Linear's bias (scalar, f32)
    # pooled_ref: (TB, C)      a_ref: (TB, TN)
    # m_sc/l_sc:  (TB, 1) f32  acc_sc: (TB, C) f32
    # n_valid:    static int or None; number of real (unpadded) patches
    n_idx = pl.program_id(1)

    @pl.when(n_idx == 0)
    def _init():
        m_sc[...] = jnp.full_like(m_sc, -jnp.inf)
        l_sc[...] = jnp.zeros_like(l_sc)
        acc_sc[...] = jnp.zeros_like(acc_sc)

    tb, tn, c = x_ref.shape
    h_dim = w1_ref.shape[1]

    x = x_ref[...]                                           # (TB, TN, C)

    # --- attention MLP -----------------------------------------------------
    # Linear(C -> H) on the MXU in the input dtype (bf16 on the fast path),
    # accumulating in f32.  Reshape only merges leading dims (layout-cheap).
    x2 = x.reshape(tb * tn, c)
    hid = jnp.dot(x2, w1_ref[...], preferred_element_type=jnp.float32)
    hid = jnp.tanh(hid + b1_ref[...])                        # (TB*TN, H) f32
    # TODO(synk): nn.Dropout(0.25) is identity in eval mode; training-mode PRNG mask not implemented.

    # Linear(H -> 1) as a VPU multiply + lane reduction (no width-1 MXU matmul,
    # keeps the logits output lane-dense).
    hid = hid.reshape(tb, tn, h_dim)
    a = jnp.sum(hid * w2_ref[...], axis=-1) + b2_ref[0]      # (TB, TN) logits
    a_ref[...] = a

    # Mask padded patches (only emitted when N was padded to a 128 multiple).
    if n_valid is not None:
        col = jax.lax.broadcasted_iota(jnp.int32, (tb, tn), 1) + n_idx * tn
        a = jnp.where(col < n_valid, a, -jnp.inf)

    # --- online softmax over the patch axis (tiled over grid axis 1) -------
    m_prev = m_sc[...]                                       # (TB, 1)
    m_new = jnp.maximum(m_prev, jnp.max(a, axis=1, keepdims=True))
    alpha = jnp.exp(m_prev - m_new)                          # rescale factor
    p = jnp.exp(a - m_new)                                   # (TB, TN) f32
    l_sc[...] = alpha * l_sc[...] + jnp.sum(p, axis=1, keepdims=True)
    # exp-weighted sum over this tile's patches; bf16 x promotes per-vreg in
    # the multiply (no full-tile f32 copy of x is materialized).
    acc_sc[...] = alpha * acc_sc[...] + jnp.sum(x * p[:, :, None], axis=1)
    m_sc[...] = m_new

    @pl.when(n_idx == pl.num_programs(1) - 1)
    def _finalize():
        inv_l = pl.reciprocal(l_sc[...], approx=False)       # exact for parity
        pooled_ref[...] = (acc_sc[...] * inv_l).astype(pooled_ref.dtype)


def _round_up(v, m):
    return ((v + m - 1) // m) * m


def _pick_tb(B, max_tb):
    """Batch tile: multiple of 8 dividing B (preferring >=2 grid iterations so
    the 'parallel' axis shards across both v7x TensorCores), else full B."""
    if B >= 8 and B % 8 == 0:
        cand = [t for t in range(8, min(max_tb, B) + 1, 8) if B % t == 0]
        if cand:
            for t in reversed(cand):
                if B // t >= 2:
                    return t
            return cand[-1]
    return B


def _pick_tn(N, max_tn):
    """Patch tile: multiple of 128 (lane-dense logit stores); pick the tile
    minimizing padded N, preferring the largest such tile."""
    cap = max(128, min(_round_up(max_tn, 128), _round_up(N, 128)))
    best = None
    for tn in range(cap, 0, -128):
        npad = _round_up(N, tn)
        key = (npad, -tn)
        if best is None or key < best[0]:
            best = (key, tn, npad)
    return best[1], best[2]


def _vmem_estimate(TB, TN, C, H, x_itemsize):
    """Rough VMEM bytes for the pipeline at a given tile choice."""
    x_tile = TB * TN * C * x_itemsize            # one x buffer
    hid_tmp = TB * TN * H * 4                    # f32 matmul output temp
    weights = 2 * (C * H * x_itemsize + 2 * H * 4)
    a_out = 2 * TB * TN * 4
    pooled_out = 2 * TB * C * 4
    scratch = TB * (2 + C) * 4
    return 2 * x_tile + hid_tmp + weights + a_out + pooled_out + scratch


def attention_pool(x, w1, b1, w2, b2, *, max_tb=16, max_tn=512,
                   compute_dtype=jnp.bfloat16,
                   vmem_budget_bytes=40 * 1024 * 1024):
    """x: (B, N, C). w1: (C, H), b1: (H,), w2: (H, 1), b2: (1,).
    Returns (pooled (B, C), A (B, N, 1)) matching the PyTorch module."""
    B, N, C = x.shape
    H = w1.shape[1]

    TB = _pick_tb(B, max_tb)
    TN, N_pad = _pick_tn(N, max_tn)

    # Shrink the patch tile until the pipeline fits the (v7x-safe) VMEM budget.
    itemsize = jnp.dtype(compute_dtype).itemsize
    while TN > 128 and _vmem_estimate(TB, TN, C, H, itemsize) > vmem_budget_bytes:
        TN -= 128
    N_pad = _round_up(N, TN)

    x_c = x.astype(compute_dtype)
    if N_pad != N:
        x_c = jnp.pad(x_c, ((0, 0), (0, N_pad - N), (0, 0)))
    n_valid = N if N_pad != N else None

    grid = (B // TB, N_pad // TN)

    est = _vmem_estimate(TB, TN, C, H, itemsize)
    vmem_limit = int(min(56 * 2**20, max(32 * 2**20, est + est // 2 + (4 << 20))))

    cost = pl.CostEstimate(
        flops=2 * B * N_pad * C * H + 3 * B * N_pad * H + 3 * B * N_pad * C,
        transcendentals=B * N_pad * H + 2 * B * N_pad,
        bytes_accessed=(itemsize * (B * N_pad * C + C * H) + 4 * (2 * H + 1)
                        + 4 * (B * C + B * N_pad)),
    )

    kernel = functools.partial(attention_pool_kernel, n_valid=n_valid)

    pooled, a = pl.pallas_call(
        kernel,
        out_shape=(
            jax.ShapeDtypeStruct((B, C), jnp.float32),
            jax.ShapeDtypeStruct((B, N_pad), jnp.float32),
        ),
        grid_spec=pltpu.PrefetchScalarGridSpec(
            num_scalar_prefetch=0,
            grid=grid,
            in_specs=[
                pl.BlockSpec((TB, TN, C), lambda b, n: (b, n, 0)),    # x tile
                pl.BlockSpec((C, H), lambda b, n: (0, 0)),            # w1 (resident)
                pl.BlockSpec((1, H), lambda b, n: (0, 0)),            # b1 (resident)
                pl.BlockSpec((1, H), lambda b, n: (0, 0)),            # w2 row (resident)
                pl.BlockSpec(memory_space=pltpu.MemorySpace.SMEM),    # b2 scalar
            ],
            out_specs=(
                pl.BlockSpec((TB, C), lambda b, n: (b, 0)),    # pooled (acc over n)
                pl.BlockSpec((TB, TN), lambda b, n: (b, n)),   # attention logits
            ),
            scratch_shapes=[
                pltpu.VMEM((TB, 1), jnp.float32),   # running max
                pltpu.VMEM((TB, 1), jnp.float32),   # running sum of exp
                pltpu.VMEM((TB, C), jnp.float32),   # running weighted sum
            ],
        ),
        compiler_params=pltpu.CompilerParams(
            dimension_semantics=("parallel", "arbitrary"),
            vmem_limit_bytes=vmem_limit,
        ),
        cost_estimate=cost,
    )(x_c,
      w1.astype(compute_dtype),
      b1.reshape(1, H).astype(jnp.float32),
      w2.reshape(1, H).astype(jnp.float32),
      b2.reshape(1).astype(jnp.float32))

    return pooled, a[:, :N].reshape(B, N, 1)


def reference(x, w1, b1, w2, b2):
    B, N, C = x.shape
    x2 = x.reshape(B * N, C)
    h = jnp.tanh(x2 @ w1 + b1)
    a = (h @ w2 + b2).reshape(B, N, 1)
    wt = jax.nn.softmax(a, axis=1)
    pooled = jnp.sum(x * wt, axis=1)
    return pooled, a


if __name__ == "__main__":
    B, N, C, H = 2, 8, 4, 32  # batch, num_patch, in_ch, hidden

    key = jax.random.PRNGKey(0)
    kx, k1, k2, k3, k4 = jax.random.split(key, 5)

    x = jax.random.normal(kx, (B, N, C), dtype=jnp.float32)
    # deterministic param init (PyTorch-like small uniform)
    w1 = jax.random.uniform(k1, (C, H), minval=-0.5, maxval=0.5, dtype=jnp.float32)
    b1 = jax.random.uniform(k2, (H,), minval=-0.5, maxval=0.5, dtype=jnp.float32)
    w2 = jax.random.uniform(k3, (H, 1), minval=-0.2, maxval=0.2, dtype=jnp.float32)
    b2 = jax.random.uniform(k4, (1,), minval=-0.2, maxval=0.2, dtype=jnp.float32)

    pooled_ref, A_ref = reference(x, w1, b1, w2, b2)

    # Exact f32 path: validates structure / padding / online softmax tightly.
    pooled32, A32 = attention_pool(x, w1, b1, w2, b2, compute_dtype=jnp.float32)
    jax.block_until_ready((pooled32, A32))
    assert pooled32.shape == (B, C) and A32.shape == (B, N, 1)
    assert jnp.allclose(pooled32, pooled_ref, atol=1e-5, rtol=1e-5)
    assert jnp.allclose(A32, A_ref, atol=1e-5, rtol=1e-5)

    # Default bf16 fast path (MXU-native, half HBM traffic): relaxed tolerance.
    pooled, A = attention_pool(x, w1, b1, w2, b2)
    jax.block_until_ready((pooled, A))
    assert pooled.shape == (B, C) and A.shape == (B, N, 1)
    assert jnp.allclose(pooled, pooled_ref, atol=3e-2, rtol=3e-2)
    assert jnp.allclose(A, A_ref, atol=3e-2, rtol=3e-2)

    print("KERNEL_OK")
</pallas_src>

<mosaic_0001>
module attributes {stable_mosaic.version = 11 : i64} {
  func.func @attention_pool_kernel(%arg0: i32, %arg1: i32, %arg2: memref<2x128x4xf32, #tpu.memory_space<vmem>>, %arg3: memref<4x32xf32, #tpu.memory_space<vmem>>, %arg4: memref<1x32xf32, #tpu.memory_space<vmem>>, %arg5: memref<1x32xf32, #tpu.memory_space<vmem>>, %arg6: memref<1xf32, #tpu.memory_space<smem>>, %arg7: memref<2x4xf32, #tpu.memory_space<vmem>>, %arg8: memref<2x128xf32, #tpu.memory_space<vmem>>, %arg9: memref<2x1xf32, #tpu.memory_space<vmem>>, %arg10: memref<2x1xf32, #tpu.memory_space<vmem>>, %arg11: memref<2x4xf32, #tpu.memory_space<vmem>>) attributes {dimension_semantics = [#tpu.dimension_semantics<parallel>, #tpu.dimension_semantics<arbitrary>], iteration_bounds = array<i64: 1, 1>, scalar_prefetch = 0 : i64, scratch_operands = 3 : i64, tpu.core_type = #tpu.core_type<tc>, window_params = [{transform_indices = @transform_0, window_bounds = array<i64: 2, 128, 4>}, {pipeline_mode = #tpu.pipeline_mode<synchronous>, transform_indices = @transform_1, window_bounds = array<i64: 4, 32>}, {pipeline_mode = #tpu.pipeline_mode<synchronous>, transform_indices = @transform_2, window_bounds = array<i64: 1, 32>}, {pipeline_mode = #tpu.pipeline_mode<synchronous>, transform_indices = @transform_3, window_bounds = array<i64: 1, 32>}, {transform_indices = @transform_4, window_bounds = array<i64: 1>}, {transform_indices = @transform_5, window_bounds = array<i64: 2, 4>}, {transform_indices = @transform_6, window_bounds = array<i64: 2, 128>}]} {
    %c0_i32 = arith.constant 0 : i32
    %0 = arith.cmpi eq, %arg1, %c0_i32 : i32
    %1 = arith.extui %0 : i1 to i32
    %c0_i32_0 = arith.constant 0 : i32
    %2 = arith.cmpi ne, %1, %c0_i32_0 : i32
    scf.if %2 {
      %cst_31 = arith.constant 0xFF800000 : f32
      %57 = vector.broadcast %cst_31 : f32 to vector<2x1xf32>
      %c0_32 = arith.constant 0 : index
      %c0_33 = arith.constant 0 : index
      %58 = vector.load %arg9[%c0_32, %c0_33] : memref<2x1xf32, #tpu.memory_space<vmem>>, vector<2x1xf32>
      tpu.vector_store %arg9[%c0_32, %c0_33], %57 {strides = array<i32>} : memref<2x1xf32, #tpu.memory_space<vmem>>, vector<2x1xf32>,
      %cst_34 = arith.constant 0.000000e+00 : f32
      %59 = vector.broadcast %cst_34 : f32 to vector<2x1xf32>
      %c0_35 = arith.constant 0 : index
      %c0_36 = arith.constant 0 : index
      %60 = vector.load %arg10[%c0_35, %c0_36] : memref<2x1xf32, #tpu.memory_space<vmem>>, vector<2x1xf32>
      tpu.vector_store %arg10[%c0_35, %c0_36], %59 {strides = array<i32>} : memref<2x1xf32, #tpu.memory_space<vmem>>, vector<2x1xf32>,
      %cst_37 = arith.constant 0.000000e+00 : f32
      %61 = vector.broadcast %cst_37 : f32 to vector<2x4xf32>
      %c0_38 = arith.constant 0 : index
      %c0_39 = arith.constant 0 : index
      %62 = vector.load %arg11[%c0_38, %c0_39] : memref<2x4xf32, #tpu.memory_space<vmem>>, vector<2x4xf32>
      tpu.vector_store %arg11[%c0_38, %c0_39], %61 {strides = array<i32>} : memref<2x4xf32, #tpu.memory_space<vmem>>, vector<2x4xf32>,
    } else {
    }
    %c0 = arith.constant 0 : index
    %c0_1 = arith.constant 0 : index
    %c0_2 = arith.constant 0 : index
    %3 = vector.load %arg2[%c0, %c0_1, %c0_2] : memref<2x128x4xf32, #tpu.memory_space<vmem>>, vector<2x128x4xf32>
    %4 = vector.shape_cast %3 : vector<2x128x4xf32> to vector<256x4xf32>
    %c0_3 = arith.constant 0 : index
    %c0_4 = arith.constant 0 : index
    %5 = vector.load %arg3[%c0_3, %c0_4] : memref<4x32xf32, #tpu.memory_space<vmem>>, vector<4x32xf32>
    %cst = arith.constant dense<0.000000e+00> : vector<256x32xf32>
    %6 = tpu.matmul %4, %5, %cst {dimension_numbers = #tpu.dot_dimension_numbers<[1], [0], [0], [1], [0, 0, 1, 1], [], []>} : vector<256x4xf32>, vector<4x32xf32>, vector<256x32xf32> -> vector<256x32xf32>
    %c0_5 = arith.constant 0 : index
    %c0_6 = arith.constant 0 : index
    %7 = vector.load %arg4[%c0_5, %c0_6] : memref<1x32xf32, #tpu.memory_space<vmem>>, vector<1x32xf32>
    %8 = vector.broadcast %7 : vector<1x32xf32> to vector<256x32xf32>
    %9 = arith.addf %6, %8 : vector<256x32xf32>
    %10 = math.tanh %9 : vector<256x32xf32>
    %11 = vector.shape_cast %10 : vector<256x32xf32> to vector<2x128x32xf32>
    %c0_7 = arith.constant 0 : index
    %c0_8 = arith.constant 0 : index
    %12 = vector.load %arg5[%c0_7, %c0_8] : memref<1x32xf32, #tpu.memory_space<vmem>>, vector<1x32xf32>
    %13 = vector.shape_cast %12 : vector<1x32xf32> to vector<1x1x32xf32>
    %14 = vector.broadcast %13 : vector<1x1x32xf32> to vector<2x128x32xf32>
    %15 = arith.mulf %11, %14 : vector<2x128x32xf32>
    %cst_9 = arith.constant dense<0.000000e+00> : vector<2x128xf32>
    %16 = vector.multi_reduction <add>, %15, %cst_9 [2] : vector<2x128x32xf32> to vector<2x128xf32>
    %c0_10 = arith.constant 0 : index
    %17 = memref.load %arg6[%c0_10] : memref<1xf32, #tpu.memory_space<smem>>
    %18 = vector.broadcast %17 : f32 to vector<2x128xf32>
    %19 = arith.addf %16, %18 : vector<2x128xf32>
    %c0_11 = arith.constant 0 : index
    %c0_12 = arith.constant 0 : index
    %20 = vector.load %arg8[%c0_11, %c0_12] : memref<2x128xf32, #tpu.memory_space<vmem>>, vector<2x128xf32>
    tpu.vector_store %arg8[%c0_11, %c0_12], %19 {strides = array<i32>} : memref<2x128xf32, #tpu.memory_space<vmem>>, vector<2x128xf32>,
    %21 = tpu.iota {dimensions = array<i32: 1>} : vector<2x128xi32>
    %c128_i32 = arith.constant 128 : i32
    %22 = arith.muli %arg1, %c128_i32 : i32
    %23 = vector.broadcast %22 : i32 to vector<2x128xi32>
    %24 = arith.addi %21, %23 : vector<2x128xi32>
    %c8_i32 = arith.constant 8 : i32
    %25 = vector.broadcast %c8_i32 : i32 to vector<2x128xi32>
    %26 = arith.cmpi slt, %24, %25 : vector<2x128xi32>
    %cst_13 = arith.constant 0xFF800000 : f32
    %27 = vector.broadcast %cst_13 : f32 to vector<2x128xf32>
    %28 = arith.select %26, %19, %27 : vector<2x128xi1>, vector<2x128xf32>
    %c0_14 = arith.constant 0 : index
    %c0_15 = arith.constant 0 : index
    %29 = vector.load %arg9[%c0_14, %c0_15] : memref<2x1xf32, #tpu.memory_space<vmem>>, vector<2x1xf32>
    %cst_16 = arith.constant dense<0xFF800000> : vector<2xf32>
    %30 = vector.multi_reduction <maximumf>, %28, %cst_16 [1] : vector<2x128xf32> to vector<2xf32>
    %31 = vector.shape_cast %30 : vector<2xf32> to vector<2x1xf32>
    %32 = arith.maximumf %29, %31 : vector<2x1xf32>
    %33 = arith.subf %29, %32 : vector<2x1xf32>
    %34 = math.exp %33 : vector<2x1xf32>
    %35 = vector.broadcast %32 : vector<2x1xf32> to vector<2x128xf32>
    %36 = arith.subf %28, %35 : vector<2x128xf32>
    %37 = math.exp %36 : vector<2x128xf32>
    %c0_17 = arith.constant 0 : index
    %c0_18 = arith.constant 0 : index
    %38 = vector.load %arg10[%c0_17, %c0_18] : memref<2x1xf32, #tpu.memory_space<vmem>>, vector<2x1xf32>
    %39 = arith.mulf %34, %38 : vector<2x1xf32>
    %cst_19 = arith.constant dense<0.000000e+00> : vector<2xf32>
    %40 = vector.multi_reduction <add>, %37, %cst_19 [1] : vector<2x128xf32> to vector<2xf32>
    %41 = vector.shape_cast %40 : vector<2xf32> to vector<2x1xf32>
    %42 = arith.addf %39, %41 : vector<2x1xf32>
    %c0_20 = arith.constant 0 : index
    %c0_21 = arith.constant 0 : index
    %43 = vector.load %arg10[%c0_20, %c0_21] : memref<2x1xf32, #tpu.memory_space<vmem>>, vector<2x1xf32>
    tpu.vector_store %arg10[%c0_20, %c0_21], %42 {strides = array<i32>} : memref<2x1xf32, #tpu.memory_space<vmem>>, vector<2x1xf32>,
    %c0_22 = arith.constant 0 : index
    %c0_23 = arith.constant 0 : index
    %44 = vector.load %arg11[%c0_22, %c0_23] : memref<2x4xf32, #tpu.memory_space<vmem>>, vector<2x4xf32>
    %45 = vector.broadcast %34 : vector<2x1xf32> to vector<2x4xf32>
    %46 = arith.mulf %45, %44 : vector<2x4xf32>
    %47 = vector.shape_cast %37 : vector<2x128xf32> to vector<2x128x1xf32>
    %48 = vector.broadcast %47 : vector<2x128x1xf32> to vector<2x128x4xf32>
    %49 = arith.mulf %3, %48 : vector<2x128x4xf32>
    %cst_24 = arith.constant dense<0.000000e+00> : vector<2x4xf32>
    %50 = vector.multi_reduction <add>, %49, %cst_24 [1] : vector<2x128x4xf32> to vector<2x4xf32>
    %51 = arith.addf %46, %50 : vector<2x4xf32>
    %c0_25 = arith.constant 0 : index
    %c0_26 = arith.constant 0 : index
    %52 = vector.load %arg11[%c0_25, %c0_26] : memref<2x4xf32, #tpu.memory_space<vmem>>, vector<2x4xf32>
    tpu.vector_store %arg11[%c0_25, %c0_26], %51 {strides = array<i32>} : memref<2x4xf32, #tpu.memory_space<vmem>>, vector<2x4xf32>,
    %c0_27 = arith.constant 0 : index
    %c0_28 = arith.constant 0 : index
    %53 = vector.load %arg9[%c0_27, %c0_28] : memref<2x1xf32, #tpu.memory_space<vmem>>, vector<2x1xf32>
    tpu.vector_store %arg9[%c0_27, %c0_28], %32 {strides = array<i32>} : memref<2x1xf32, #tpu.memory_space<vmem>>, vector<2x1xf32>,
    %c0_i32_29 = arith.constant 0 : i32
    %54 = arith.cmpi eq, %arg1, %c0_i32_29 : i32
    %55 = arith.extui %54 : i1 to i32
    %c0_i32_30 = arith.constant 0 : i32
    %56 = arith.cmpi ne, %55, %c0_i32_30 : i32
    scf.if %56 {
      %c0_31 = arith.constant 0 : index
      %c0_32 = arith.constant 0 : index
      %57 = vector.load %arg10[%c0_31, %c0_32] : memref<2x1xf32, #tpu.memory_space<vmem>>, vector<2x1xf32>
      %58 = tpu.reciprocal %57 : vector<2x1xf32> -> vector<2x1xf32>
      %c0_33 = arith.constant 0 : index
      %c0_34 = arith.constant 0 : index
      %59 = vector.load %arg11[%c0_33, %c0_34] : memref<2x4xf32, #tpu.memory_space<vmem>>, vector<2x4xf32>
      %60 = vector.broadcast %58 : vector<2x1xf32> to vector<2x4xf32>
      %61 = arith.mulf %59, %60 : vector<2x4xf32>
      %c0_35 = arith.constant 0 : index
      %c0_36 = arith.constant 0 : index
      %62 = vector.load %arg7[%c0_35, %c0_36] : memref<2x4xf32, #tpu.memory_space<vmem>>, vector<2x4xf32>
      tpu.vector_store %arg7[%c0_35, %c0_36], %61 {strides = array<i32>} : memref<2x4xf32, #tpu.memory_space<vmem>>, vector<2x4xf32>,
    } else {
    }
    return
  }
  func.func @transform_0(%arg0: i32, %arg1: i32) -> (i32, i32, i32) {
    %c0_i32 = arith.constant 0 : i32
    %c0_i32_0 = arith.constant 0 : i32
    return %arg0, %arg1, %c0_i32 : i32, i32, i32
  }
  func.func @transform_1(%arg0: i32, %arg1: i32) -> (i32, i32) {
    %c0_i32 = arith.constant 0 : i32
    %c0_i32_0 = arith.constant 0 : i32
    %c0_i32_1 = arith.constant 0 : i32
    return %c0_i32, %c0_i32_0 : i32, i32
  }
  func.func @transform_2(%arg0: i32, %arg1: i32) -> (i32, i32) {
    %c0_i32 = arith.constant 0 : i32
    %c0_i32_0 = arith.constant 0 : i32
    %c0_i32_1 = arith.constant 0 : i32
    return %c0_i32, %c0_i32_0 : i32, i32
  }
  func.func @transform_3(%arg0: i32, %arg1: i32) -> (i32, i32) {
    %c0_i32 = arith.constant 0 : i32
    %c0_i32_0 = arith.constant 0 : i32
    %c0_i32_1 = arith.constant 0 : i32
    return %c0_i32, %c0_i32_0 : i32, i32
  }
  func.func @transform_4(%arg0: i32, %arg1: i32) -> i32 {
    %c0_i32 = arith.constant 0 : i32
    %c0_i32_0 = arith.constant 0 : i32
    return %c0_i32 : i32
  }
  func.func @transform_5(%arg0: i32, %arg1: i32) -> (i32, i32) {
    %c0_i32 = arith.constant 0 : i32
    %c0_i32_0 = arith.constant 0 : i32
    return %arg0, %c0_i32 : i32, i32
  }
  func.func @transform_6(%arg0: i32, %arg1: i32) -> (i32, i32) {
    %c0_i32 = arith.constant 0 : i32
    return %arg0, %arg1 : i32, i32
  }
}

</mosaic_0001>

<llo_original>
// kernel: tpu_custom_call.1
$region0: #{tpu_custom_call.1}
  #allocation0 [shape = 'u32[]', space=smem, size = 0x4, offset = 0x4, fixed_abs, tag = 'smem constant byte address 0x4 - core index']
  #allocation1 [shape = 'u32[144,128]{1,0:T(1,128)}', space=vmem, size = 0x12000, scoped, tag = 'internal scratch']
  #allocation2 [shape = 'f32[2,1]{1,0:T(2,128)}', space=vmem, size = 0x400, scoped, tag = 'scratch operand']
  #allocation3 [shape = 'f32[2,1]{1,0:T(2,128)}', space=vmem, size = 0x400, scoped, tag = 'scratch operand']
  #allocation4 [shape = 'f32[2,4]{1,0:T(2,128)}', space=vmem, size = 0x400, scoped, tag = 'scratch operand']
  #allocation5 [shape = 'f32[1]{0:T(128)S(6)}', space=smem, size = 0x200, scoped, tag = 'scoped memory for tpu_custom_call.1']
  %s0 = inlined_call_operand.vmem [shape: f32[2,128,4], index: 0, kind: input, shape index: {}]
  %s1 = inlined_call_operand.vmem [shape: f32[4,32], index: 1, kind: input, shape index: {}]
  %s2 = inlined_call_operand.vmem [shape: f32[1,32], index: 2, kind: input, shape index: {}]
  %s3 = inlined_call_operand.vmem [shape: f32[1,32], index: 3, kind: input, shape index: {}]
  %s4 = inlined_call_operand.<no memory space> [shape: f32[1], index: 4, kind: input, shape index: {}]
  %s5 = inlined_call_operand.hbm [shape: f32[2,4], index: 5, kind: output, shape index: {0}]
  %s6 = inlined_call_operand.hbm [shape: f32[2,128], index: 6, kind: output, shape index: {1}]
  %7 = xla_tuple %s5, %s6
  %s8 = sld [smem:[#allocation0]]
  $region46: #{tpu_custom_call.1} parent=0
    _
  %s10 = ssub.s32 1, %s8
  %s11 = scalar_select 0, %s10, %s8
  %12 = sst [smem:[#allocation5]] %s4
  $region1: #{tpu_custom_call.1} parent=0
    #allocation6 [shape = 'u8[1024]{0}', space=vmem, size = 0x400, scoped, tag = 'output window, operand 0, single buffered']
    #allocation7 [shape = 's32[1]{0}', space=sflag, size = 0x4, scoped, tag = 'scoped memory for tpu_custom_call.1']
    #allocation8 [shape = 'u8[1024]{0}', space=vmem, size = 0x400, scoped, tag = 'output window, operand 1, single buffered']
    #allocation9 [shape = 's32[1]{0}', space=sflag, size = 0x4, scoped, tag = 'scoped memory for tpu_custom_call.1']
    %13 = vsyncpa [#allocation7], 0
    %14 = vsyncpa [#allocation9], 0
    // Predicated region
    $region2: #{tpu_custom_call.1} parent=1 // pred_check
      _
    $region3: #{tpu_custom_call.1} parent=1 // pred_check_branch
      %16 = sbr.rel (0) target = $region5
    $region4: #{tpu_custom_call.1} parent=1 // pred_region
      _
    $region5: #{tpu_custom_call.1} parent=1 // pred_fallthru
      _
    // Predicated region
    $region6: #{tpu_custom_call.1} parent=1 // pred_check
      _
    $region7: #{tpu_custom_call.1} parent=1 // pred_check_branch
      %18 = sbr.rel (0) target = $region9
    $region8: #{tpu_custom_call.1} parent=1 // pred_region
      _
    $region9: #{tpu_custom_call.1} parent=1 // pred_fallthru
      _
    // Predicated region
    $region10: #{tpu_custom_call.1} parent=1 // pred_check
      _
    $region11: #{tpu_custom_call.1} parent=1 // pred_check_branch
      %20 = sbr.rel (0) target = $region13
    $region12: #{tpu_custom_call.1} parent=1 // pred_region
      _
    $region13: #{tpu_custom_call.1} parent=1 // pred_fallthru
      _
    // Predicated region
    $region14: #{tpu_custom_call.1} parent=1 // pred_check
      _
    $region15: #{tpu_custom_call.1} parent=1 // pred_check_branch
      %22 = sbr.rel (0) target = $region17
    $region16: #{tpu_custom_call.1} parent=1 // pred_region
      _
    $region17: #{tpu_custom_call.1} parent=1 // pred_fallthru
      _
    // Predicated region
    $region18: #{tpu_custom_call.1} parent=1 // pred_check
      _
    $region19: #{tpu_custom_call.1} parent=1 // pred_check_branch
      %24 = sbr.rel (0) target = $region21
    $region20: #{tpu_custom_call.1} parent=1 // pred_region
      _
    $region21: #{tpu_custom_call.1} parent=1 // pred_fallthru
      _
    %p25 = scmp.eq.s32.totalorder 0, 0
    // Predicated region
    $region22: #{tpu_custom_call.1} parent=1 // pred_check
      %p26 = pneg %p25
    $region23: #{tpu_custom_call.1} parent=1 // pred_check_branch
      %28 = sbr.rel (%p26) target = $region25
    $region24: #{tpu_custom_call.1} parent=1 // pred_region
      %vm29 = vcmask 1024
      %30 = vst.msk [vmem:[#allocation2] sm:$0x3] %vm29, -inf
      %31 = vst.msk [vmem:[#allocation3] sm:$0x3] %vm29, 0.0
      %vm32 = vcmask 25600
      %33 = vst.msk [vmem:[#allocation4] sm:$0x3] %vm32, 0.0
    $region25: #{tpu_custom_call.1} parent=1 // pred_fallthru
      _
    %v34 = vld [vmem:[%s0] sm:$0xff]
    %v35 = vld [vmem:[%s0 + $0x8] sm:$0xff]
    %v36 = vld [vmem:[%s0 + $0x10] sm:$0xff]
    %v37 = vld [vmem:[%s0 + $0x18] sm:$0xff]
    %v38 = vld [vmem:[%s0 + $0x20] sm:$0xff]
    %v39 = vld [vmem:[%s0 + $0x28] sm:$0xff]
    %v40 = vld [vmem:[%s0 + $0x30] sm:$0xff]
    %v41 = vld [vmem:[%s0 + $0x38] sm:$0xff]
    %v42 = vld [vmem:[%s0 + $0x40] sm:$0xff]
    %v43 = vld [vmem:[%s0 + $0x48] sm:$0xff]
    %v44 = vld [vmem:[%s0 + $0x50] sm:$0xff]
    %v45 = vld [vmem:[%s0 + $0x58] sm:$0xff]
    %v46 = vld [vmem:[%s0 + $0x60] sm:$0xff]
    %v47 = vld [vmem:[%s0 + $0x68] sm:$0xff]
    %v48 = vld [vmem:[%s0 + $0x70] sm:$0xff]
    %v49 = vld [vmem:[%s0 + $0x78] sm:$0xff]
    %v50 = vld [vmem:[%s0 + $0x80] sm:$0xff]
    %v51 = vld [vmem:[%s0 + $0x88] sm:$0xff]
    %v52 = vld [vmem:[%s0 + $0x90] sm:$0xff]
    %v53 = vld [vmem:[%s0 + $0x98] sm:$0xff]
    %v54 = vld [vmem:[%s0 + $0xa0] sm:$0xff]
    %v55 = vld [vmem:[%s0 + $0xa8] sm:$0xff]
    %v56 = vld [vmem:[%s0 + $0xb0] sm:$0xff]
    %v57 = vld [vmem:[%s0 + $0xb8] sm:$0xff]
    %v58 = vld [vmem:[%s0 + $0xc0] sm:$0xff]
    %v59 = vld [vmem:[%s0 + $0xc8] sm:$0xff]
    %v60 = vld [vmem:[%s0 + $0xd0] sm:$0xff]
    %v61 = vld [vmem:[%s0 + $0xd8] sm:$0xff]
    %v62 = vld [vmem:[%s0 + $0xe0] sm:$0xff]
    %v63 = vld [vmem:[%s0 + $0xe8] sm:$0xff]
    %v64 = vld [vmem:[%s0 + $0xf0] sm:$0xff]
    %v65 = vld [vmem:[%s0 + $0xf8] sm:$0xff]
    %v66 = vld [vmem:[%s1] sm:$0xf]
    %v67 = vld [vmem:[%s2] sm:$0x1]
    %v69 = vlaneseq
    %v70 = vshrl.u32 %v69, 7
    %v71 = vsub.s32 0, %v70
    %v72 = vrot.slane %v67, %v71
    %vm74 = vcmask 31744
    %v76 = vsel %vm74, %v34, 0
    %v79 = vsel %vm74, %v35, 0
    %v82 = vsel %vm74, %v36, 0
    %v85 = vsel %vm74, %v37, 0
    %v88 = vsel %vm74, %v38, 0
    %v91 = vsel %vm74, %v39, 0
    %v94 = vsel %vm74, %v40, 0
    %v97 = vsel %vm74, %v41, 0
    %v100 = vsel %vm74, %v42, 0
    %v103 = vsel %vm74, %v43, 0
    %v106 = vsel %vm74, %v44, 0
    %v109 = vsel %vm74, %v45, 0
    %v112 = vsel %vm74, %v46, 0
    %v115 = vsel %vm74, %v47, 0
    %v118 = vsel %vm74, %v48, 0
    %v121 = vsel %vm74, %v49, 0
    %v124 = vsel %vm74, %v50, 0
    %v127 = vsel %vm74, %v51, 0
    %v130 = vsel %vm74, %v52, 0
    %v133 = vsel %vm74, %v53, 0
    %v136 = vsel %vm74, %v54, 0
    %v139 = vsel %vm74, %v55, 0
    %v142 = vsel %vm74, %v56, 0
    %v145 = vsel %vm74, %v57, 0
    %v148 = vsel %vm74, %v58, 0
    %v151 = vsel %vm74, %v59, 0
    %v154 = vsel %vm74, %v60, 0
    %v157 = vsel %vm74, %v61, 0
    %v160 = vsel %vm74, %v62, 0
    %v163 = vsel %vm74, %v63, 0
    %v166 = vsel %vm74, %v64, 0
    %v169 = vsel %vm74, %v65, 0
    %vm171 = vcmask 1043456
    %v173 = vsel %vm171, %v66, 0
    %175 = vmatprep.subr.mxu0 0.0
    %176 = vmatpush1.msra.mxu0 0.0
    %177 = vmatprep.subr.mxu0 0.0
    %178 = vmatpush1.msra.mxu0 0.0
    %179 = vmatprep.subr.mxu0 0.0
    %180 = vmatpush1.msra.mxu0 0.0
    %181 = vmatprep.subr.mxu0 0.0
    %182 = vmatpush1.msra.mxu0 0.0
    %183 = vmatprep.subr.mxu0 0.0
    %184 = vmatpush1.msra.mxu0 0.0
    %185 = vmatprep.subr.mxu0 0.0
    %186 = vmatpush1.msra.mxu0 0.0
    %187 = vmatprep.subr.mxu0 0.0
    %188 = vmatpush1.msra.mxu0 0.0
    %189 = vmatprep.subr.mxu0 0.0
    %190 = vmatpush1.msra.mxu0 0.0
    %191 = vmatprep.subr.mxu0 0.0
    %192 = vmatpush1.msra.mxu0 0.0
    %193 = vmatprep.subr.mxu0 0.0
    %194 = vmatpush1.msra.mxu0 0.0
    %195 = vmatprep.subr.mxu0 0.0
    %196 = vmatpush1.msra.mxu0 0.0
    %197 = vmatprep.subr.mxu0 0.0
    %198 = vmatpush1.msra.mxu0 0.0
    %199 = vmatprep.subr.mxu0 0.0
    %200 = vmatpush1.msra.mxu0 0.0
    %201 = vmatprep.subr.mxu0 0.0
    %202 = vmatpush1.msra.mxu0 0.0
    %203 = vmatprep.subr.mxu0 0.0
    %204 = vmatpush1.msra.mxu0 0.0
    %205 = vmatprep.subr.mxu0 0.0
    %206 = vmatpush1.msra.mxu0 %v173
    %207 = vmatprep.subr.mxu0 0.0
    %208 = vmatpush2.msra.mxu0 0.0
    %209 = vmatprep.subr.mxu0 0.0
    %210 = vmatpush2.msra.mxu0 0.0
    %211 = vmatprep.subr.mxu0 0.0
    %212 = vmatpush2.msra.mxu0 0.0
    %213 = vmatprep.subr.mxu0 0.0
    %214 = vmatpush2.msra.mxu0 0.0
    %215 = vmatprep.subr.mxu0 0.0
    %216 = vmatpush2.msra.mxu0 0.0
    %217 = vmatprep.subr.mxu0 0.0
    %218 = vmatpush2.msra.mxu0 0.0
    %219 = vmatprep.subr.mxu0 0.0
    %220 = vmatpush2.msra.mxu0 0.0
    %221 = vmatprep.subr.mxu0 0.0
    %222 = vmatpush2.msra.mxu0 0.0
    %223 = vmatprep.subr.mxu0 0.0
    %224 = vmatpush2.msra.mxu0 0.0
    %225 = vmatprep.subr.mxu0 0.0
    %226 = vmatpush2.msra.mxu0 0.0
    %227 = vmatprep.subr.mxu0 0.0
    %228 = vmatpush2.msra.mxu0 0.0
    %229 = vmatprep.subr.mxu0 0.0
    %230 = vmatpush2.msra.mxu0 0.0
    %231 = vmatprep.subr.mxu0 0.0
    %232 = vmatpush2.msra.mxu0 0.0
    %233 = vmatprep.subr.mxu0 0.0
    %234 = vmatpush2.msra.mxu0 0.0
    %235 = vmatprep.subr.mxu0 0.0
    %236 = vmatpush2.msra.mxu0 0.0
    %237 = vmatprep.subr.mxu0 0.0
    %238 = vmatpush2.msra.mxu0 0.0
    %239 = vmatprep.mubr.f32.mxu0 0.0
    %240 = vmatmul.mubr.f32.gmra.mxu0 %v76
    %v241 = vpop.f32.mrf.mxu0
    %v242 = vadd.f32 %v72, %v241
    %v243 = vpop.f32.mrf.mxu0
    %244 = vmatprep.mubr.f32.mxu0 0.0
    %245 = vmatmul.mubr.f32.gmra.mxu0 %v79
    %v246 = vpop.f32.mrf.mxu0
    %v247 = vadd.f32 %v72, %v246
    %v248 = vpop.f32.mrf.mxu0
    %249 = vmatprep.mubr.f32.mxu0 0.0
    %250 = vmatmul.mubr.f32.gmra.mxu0 %v82
    %v251 = vpop.f32.mrf.mxu0
    %v252 = vadd.f32 %v72, %v251
    %v253 = vpop.f32.mrf.mxu0
    %254 = vmatprep.mubr.f32.mxu0 0.0
    %255 = vmatmul.mubr.f32.gmra.mxu0 %v85
    %v256 = vpop.f32.mrf.mxu0
    %v257 = vadd.f32 %v72, %v256
    %v258 = vpop.f32.mrf.mxu0
    %259 = vmatprep.mubr.f32.mxu0 0.0
    %260 = vmatmul.mubr.f32.gmra.mxu0 %v88
    %v261 = vpop.f32.mrf.mxu0
    %v262 = vadd.f32 %v72, %v261
    %v263 = vpop.f32.mrf.mxu0
    %264 = vmatprep.mubr.f32.mxu0 0.0
    %265 = vmatmul.mubr.f32.gmra.mxu0 %v91
    %v266 = vpop.f32.mrf.mxu0
    %v267 = vadd.f32 %v72, %v266
    %v268 = vpop.f32.mrf.mxu0
    %269 = vmatprep.mubr.f32.mxu0 0.0
    %270 = vmatmul.mubr.f32.gmra.mxu0 %v94
    %v271 = vpop.f32.mrf.mxu0
    %v272 = vadd.f32 %v72, %v271
    %v273 = vpop.f32.mrf.mxu0
    %274 = vmatprep.mubr.f32.mxu0 0.0
    %275 = vmatmul.mubr.f32.gmra.mxu0 %v97
    %v276 = vpop.f32.mrf.mxu0
    %v277 = vadd.f32 %v72, %v276
    %v278 = vpop.f32.mrf.mxu0
    %279 = vmatprep.mubr.f32.mxu0 0.0
    %280 = vmatmul.mubr.f32.gmra.mxu0 %v100
    %v281 = vpop.f32.mrf.mxu0
    %v282 = vadd.f32 %v72, %v281
    %v283 = vpop.f32.mrf.mxu0
    %284 = vmatprep.mubr.f32.mxu0 0.0
    %285 = vmatmul.mubr.f32.gmra.mxu0 %v103
    %v286 = vpop.f32.mrf.mxu0
    %v287 = vadd.f32 %v72, %v286
    %v288 = vpop.f32.mrf.mxu0
    %289 = vmatprep.mubr.f32.mxu0 0.0
    %290 = vmatmul.mubr.f32.gmra.mxu0 %v106
    %v291 = vpop.f32.mrf.mxu0
    %v292 = vadd.f32 %v72, %v291
    %v293 = vpop.f32.mrf.mxu0
    %294 = vmatprep.mubr.f32.mxu0 0.0
    %295 = vmatmul.mubr.f32.gmra.mxu0 %v109
    %v296 = vpop.f32.mrf.mxu0
    %v297 = vadd.f32 %v72, %v296
    %v298 = vpop.f32.mrf.mxu0
    %299 = vmatprep.mubr.f32.mxu0 0.0
    %300 = vmatmul.mubr.f32.gmra.mxu0 %v112
    %v301 = vpop.f32.mrf.mxu0
    %v302 = vadd.f32 %v72, %v301
    %v303 = vpop.f32.mrf.mxu0
    %304 = vmatprep.mubr.f32.mxu0 0.0
    %305 = vmatmul.mubr.f32.gmra.mxu0 %v115
    %v306 = vpop.f32.mrf.mxu0
    %v307 = vadd.f32 %v72, %v306
    %v308 = vpop.f32.mrf.mxu0
    %309 = vmatprep.mubr.f32.mxu0 0.0
    %310 = vmatmul.mubr.f32.gmra.mxu0 %v118
    %v311 = vpop.f32.mrf.mxu0
    %v312 = vadd.f32 %v72, %v311
    %v313 = vpop.f32.mrf.mxu0
    %314 = vmatprep.mubr.f32.mxu0 0.0
    %315 = vmatmul.mubr.f32.gmra.mxu0 %v121
    %v316 = vpop.f32.mrf.mxu0
    %v317 = vadd.f32 %v72, %v316
    %v318 = vpop.f32.mrf.mxu0
    %319 = vmatprep.mubr.f32.mxu0 0.0
    %320 = vmatmul.mubr.f32.gmra.mxu0 %v124
    %v321 = vpop.f32.mrf.mxu0
    %v322 = vadd.f32 %v72, %v321
    %v323 = vpop.f32.mrf.mxu0
    %324 = vmatprep.mubr.f32.mxu0 0.0
    %325 = vmatmul.mubr.f32.gmra.mxu0 %v127
    %v326 = vpop.f32.mrf.mxu0
    %v327 = vadd.f32 %v72, %v326
    %v328 = vpop.f32.mrf.mxu0
    %329 = vmatprep.mubr.f32.mxu0 0.0
    %330 = vmatmul.mubr.f32.gmra.mxu0 %v130
    %v331 = vpop.f32.mrf.mxu0
    %v332 = vadd.f32 %v72, %v331
    %v333 = vpop.f32.mrf.mxu0
    %334 = vmatprep.mubr.f32.mxu0 0.0
    %335 = vmatmul.mubr.f32.gmra.mxu0 %v133
    %v336 = vpop.f32.mrf.mxu0
    %v337 = vadd.f32 %v72, %v336
    %v338 = vpop.f32.mrf.mxu0
    %339 = vmatprep.mubr.f32.mxu0 0.0
    %340 = vmatmul.mubr.f32.gmra.mxu0 %v136
    %v341 = vpop.f32.mrf.mxu0
    %v342 = vadd.f32 %v72, %v341
    %v343 = vpop.f32.mrf.mxu0
    %344 = vmatprep.mubr.f32.mxu0 0.0
    %345 = vmatmul.mubr.f32.gmra.mxu0 %v139
    %v346 = vpop.f32.mrf.mxu0
    %v347 = vadd.f32 %v72, %v346
    %v348 = vpop.f32.mrf.mxu0
    %349 = vmatprep.mubr.f32.mxu0 0.0
    %350 = vmatmul.mubr.f32.gmra.mxu0 %v142
    %v351 = vpop.f32.mrf.mxu0
    %v352 = vadd.f32 %v72, %v351
    %v353 = vpop.f32.mrf.mxu0
    %354 = vmatprep.mubr.f32.mxu0 0.0
    %355 = vmatmul.mubr.f32.gmra.mxu0 %v145
    %v356 = vpop.f32.mrf.mxu0
    %v357 = vadd.f32 %v72, %v356
    %v358 = vpop.f32.mrf.mxu0
    %359 = vmatprep.mubr.f32.mxu0 0.0
    %360 = vmatmul.mubr.f32.gmra.mxu0 %v148
    %v361 = vpop.f32.mrf.mxu0
    %v362 = vadd.f32 %v72, %v361
    %v363 = vpop.f32.mrf.mxu0
    %364 = vmatprep.mubr.f32.mxu0 0.0
    %365 = vmatmul.mubr.f32.gmra.mxu0 %v151
    %v366 = vpop.f32.mrf.mxu0
    %v367 = vadd.f32 %v72, %v366
    %v368 = vpop.f32.mrf.mxu0
    %369 = vmatprep.mubr.f32.mxu0 0.0
    %370 = vmatmul.mubr.f32.gmra.mxu0 %v154
    %v371 = vpop.f32.mrf.mxu0
    %v372 = vadd.f32 %v72, %v371
    %v373 = vpop.f32.mrf.mxu0
    %374 = vmatprep.mubr.f32.mxu0 0.0
    %375 = vmatmul.mubr.f32.gmra.mxu0 %v157
    %v376 = vpop.f32.mrf.mxu0
    %v377 = vadd.f32 %v72, %v376
    %v378 = vpop.f32.mrf.mxu0
    %379 = vmatprep.mubr.f32.mxu0 0.0
    %380 = vmatmul.mubr.f32.gmra.mxu0 %v160
    %v381 = vpop.f32.mrf.mxu0
    %v382 = vadd.f32 %v72, %v381
    %v383 = vpop.f32.mrf.mxu0
    %384 = vmatprep.mubr.f32.mxu0 0.0
    %385 = vmatmul.mubr.f32.gmra.mxu0 %v163
    %v386 = vpop.f32.mrf.mxu0
    %v387 = vadd.f32 %v72, %v386
    %v388 = vpop.f32.mrf.mxu0
    %389 = vmatprep.mubr.f32.mxu0 0.0
    %390 = vmatmul.mubr.f32.gmra.mxu0 %v166
    %v391 = vpop.f32.mrf.mxu0
    %v392 = vadd.f32 %v72, %v391
    %v393 = vpop.f32.mrf.mxu0
    %394 = vmatprep.mubr.f32.mxu0 0.0
    %395 = vmatmul.mubr.f32.gmra.mxu0 %v169
    %v396 = vpop.f32.mrf.mxu0
    %v397 = vadd.f32 %v72, %v396
    %v398 = vpop.f32.mrf.mxu0
    %399 = vdwg.mxu0
    %v400 = vtanh.pop %v242
    %v401 = vtanh.pop %v247
    %v402 = vtanh.pop %v252
    %v403 = vtanh.pop %v257
    %v404 = vtanh.pop %v262
    %v405 = vtanh.pop %v267
    %v406 = vtanh.pop %v272
    %v407 = vtanh.pop %v277
    %v408 = vtanh.pop %v282
    %v409 = vtanh.pop %v287
    %v410 = vtanh.pop %v292
    %v411 = vtanh.pop %v297
    %v412 = vtanh.pop %v302
    %v413 = vtanh.pop %v307
    %v414 = vtanh.pop %v312
    %v415 = vtanh.pop %v317
    %v416 = vtanh.pop %v322
    %v417 = vtanh.pop %v327
    %v418 = vtanh.pop %v332
    %v419 = vtanh.pop %v337
    %v420 = vtanh.pop %v342
    %v421 = vtanh.pop %v347
    %v422 = vtanh.pop %v352
    %v423 = vtanh.pop %v357
    %v424 = vtanh.pop %v362
    %v425 = vtanh.pop %v367
    %v426 = vtanh.pop %v372
    %v427 = vtanh.pop %v377
    %v428 = vtanh.pop %v382
    %v429 = vtanh.pop %v387
    %v430 = vtanh.pop %v392
    %v431 = vtanh.pop %v397
    %v432 = vld [vmem:[%s3] sm:$0x1]
    %v434 = vlaneseq
    %v435 = vshrl.u32 %v434, 7
    %v436 = vsub.s32 0, %v435
    %v437 = vrot.slane %v432, %v436
    %v439 = vmul.f32 %v400, %v437
    %v440 = vmul.f32 %v401, %v437
    %v441 = vmul.f32 %v402, %v437
    %v442 = vmul.f32 %v403, %v437
    %v443 = vmul.f32 %v404, %v437
    %v444 = vmul.f32 %v405, %v437
    %v445 = vmul.f32 %v406, %v437
    %v446 = vmul.f32 %v407, %v437
    %v447 = vmul.f32 %v408, %v437
    %v448 = vmul.f32 %v409, %v437
    %v449 = vmul.f32 %v410, %v437
    %v450 = vmul.f32 %v411, %v437
    %v451 = vmul.f32 %v412, %v437
    %v452 = vmul.f32 %v413, %v437
    %v453 = vmul.f32 %v414, %v437
    %v454 = vmul.f32 %v415, %v437
    %v455 = vmul.f32 %v416, %v437
    %v456 = vmul.f32 %v417, %v437
    %v457 = vmul.f32 %v418, %v437
    %v458 = vmul.f32 %v419, %v437
    %v459 = vmul.f32 %v420, %v437
    %v460 = vmul.f32 %v421, %v437
    %v461 = vmul.f32 %v422, %v437
    %v462 = vmul.f32 %v423, %v437
    %v463 = vmul.f32 %v424, %v437
    %v464 = vmul.f32 %v425, %v437
    %v465 = vmul.f32 %v426, %v437
    %v466 = vmul.f32 %v427, %v437
    %v467 = vmul.f32 %v428, %v437
    %v468 = vmul.f32 %v429, %v437
    %v469 = vmul.f32 %v430, %v437
    %v470 = vmul.f32 %v431, %v437
    %vm471 = vcmask 261120
    %v472 = vsel %vm471, %v439, 0.0
    %473 = vadd.xlane.f32.xlu0 %v472
    %v474 = vpop.xlane.xlu0 %473
    %v475 = vsel %vm471, %v440, 0.0
    %476 = vadd.xlane.f32.xlu0 %v475
    %v477 = vpop.xlane.xlu0 %476
    %v478 = vsel %vm471, %v441, 0.0
    %479 = vadd.xlane.f32.xlu0 %v478
    %v480 = vpop.xlane.xlu0 %479
    %v481 = vsel %vm471, %v442, 0.0
    %482 = vadd.xlane.f32.xlu0 %v481
    %v483 = vpop.xlane.xlu0 %482
    %v484 = vsel %vm471, %v443, 0.0
    %485 = vadd.xlane.f32.xlu0 %v484
    %v486 = vpop.xlane.xlu0 %485
    %v487 = vsel %vm471, %v444, 0.0
    %488 = vadd.xlane.f32.xlu0 %v487
    %v489 = vpop.xlane.xlu0 %488
    %v490 = vsel %vm471, %v445, 0.0
    %491 = vadd.xlane.f32.xlu0 %v490
    %v492 = vpop.xlane.xlu0 %491
    %v493 = vsel %vm471, %v446, 0.0
    %494 = vadd.xlane.f32.xlu0 %v493
    %v495 = vpop.xlane.xlu0 %494
    %v496 = vsel %vm471, %v447, 0.0
    %497 = vadd.xlane.f32.xlu0 %v496
    %v498 = vpop.xlane.xlu0 %497
    %v499 = vsel %vm471, %v448, 0.0
    %500 = vadd.xlane.f32.xlu0 %v499
    %v501 = vpop.xlane.xlu0 %500
    %v502 = vsel %vm471, %v449, 0.0
    %503 = vadd.xlane.f32.xlu0 %v502
    %v504 = vpop.xlane.xlu0 %503
    %v505 = vsel %vm471, %v450, 0.0
    %506 = vadd.xlane.f32.xlu0 %v505
    %v507 = vpop.xlane.xlu0 %506
    %v508 = vsel %vm471, %v451, 0.0
    %509 = vadd.xlane.f32.xlu0 %v508
    %v510 = vpop.xlane.xlu0 %509
    %v511 = vsel %vm471, %v452, 0.0
    %512 = vadd.xlane.f32.xlu0 %v511
    %v513 = vpop.xlane.xlu0 %512
    %v514 = vsel %vm471, %v453, 0.0
    %515 = vadd.xlane.f32.xlu0 %v514
    %v516 = vpop.xlane.xlu0 %515
    %v517 = vsel %vm471, %v454, 0.0
    %518 = vadd.xlane.f32.xlu0 %v517
    %v519 = vpop.xlane.xlu0 %518
    %v520 = vsel %vm471, %v455, 0.0
    %521 = vadd.xlane.f32.xlu0 %v520
    %v522 = vpop.xlane.xlu0 %521
    %v523 = vsel %vm471, %v456, 0.0
    %524 = vadd.xlane.f32.xlu0 %v523
    %v525 = vpop.xlane.xlu0 %524
    %v526 = vsel %vm471, %v457, 0.0
    %527 = vadd.xlane.f32.xlu0 %v526
    %v528 = vpop.xlane.xlu0 %527
    %v529 = vsel %vm471, %v458, 0.0
    %530 = vadd.xlane.f32.xlu0 %v529
    %v531 = vpop.xlane.xlu0 %530
    %v532 = vsel %vm471, %v459, 0.0
    %533 = vadd.xlane.f32.xlu0 %v532
    %v534 = vpop.xlane.xlu0 %533
    %v535 = vsel %vm471, %v460, 0.0
    %536 = vadd.xlane.f32.xlu0 %v535
    %v537 = vpop.xlane.xlu0 %536
    %v538 = vsel %vm471, %v461, 0.0
    %539 = vadd.xlane.f32.xlu0 %v538
    %v540 = vpop.xlane.xlu0 %539
    %v541 = vsel %vm471, %v462, 0.0
    %542 = vadd.xlane.f32.xlu0 %v541
    %v543 = vpop.xlane.xlu0 %542
    %v544 = vsel %vm471, %v463, 0.0
    %545 = vadd.xlane.f32.xlu0 %v544
    %v546 = vpop.xlane.xlu0 %545
    %v547 = vsel %vm471, %v464, 0.0
    %548 = vadd.xlane.f32.xlu0 %v547
    %v549 = vpop.xlane.xlu0 %548
    %v550 = vsel %vm471, %v465, 0.0
    %551 = vadd.xlane.f32.xlu0 %v550
    %v552 = vpop.xlane.xlu0 %551
    %v553 = vsel %vm471, %v466, 0.0
    %554 = vadd.xlane.f32.xlu0 %v553
    %v555 = vpop.xlane.xlu0 %554
    %v556 = vsel %vm471, %v467, 0.0
    %557 = vadd.xlane.f32.xlu0 %v556
    %v558 = vpop.xlane.xlu0 %557
    %v559 = vsel %vm471, %v468, 0.0
    %560 = vadd.xlane.f32.xlu0 %v559
    %v561 = vpop.xlane.xlu0 %560
    %v562 = vsel %vm471, %v469, 0.0
    %563 = vadd.xlane.f32.xlu0 %v562
    %v564 = vpop.xlane.xlu0 %563
    %v565 = vsel %vm471, %v470, 0.0
    %566 = vadd.xlane.f32.xlu0 %v565
    %v567 = vpop.xlane.xlu0 %566
    %s568 = sld [smem:[#allocation5]]
    %v569 = vstv %s568
    %v570 = vadd.f32 %v474, %v569
    %v571 = vadd.f32 %v477, %v569
    %v572 = vadd.f32 %v480, %v569
    %v573 = vadd.f32 %v483, %v569
    %v574 = vadd.f32 %v486, %v569
    %v575 = vadd.f32 %v489, %v569
    %v576 = vadd.f32 %v492, %v569
    %v577 = vadd.f32 %v495, %v569
    %v578 = vadd.f32 %v498, %v569
    %v579 = vadd.f32 %v501, %v569
    %v580 = vadd.f32 %v504, %v569
    %v581 = vadd.f32 %v507, %v569
    %v582 = vadd.f32 %v510, %v569
    %v583 = vadd.f32 %v513, %v569
    %v584 = vadd.f32 %v516, %v569
    %v585 = vadd.f32 %v519, %v569
    %v586 = vadd.f32 %v522, %v569
    %v587 = vadd.f32 %v525, %v569
    %v588 = vadd.f32 %v528, %v569
    %v589 = vadd.f32 %v531, %v569
    %v590 = vadd.f32 %v534, %v569
    %v591 = vadd.f32 %v537, %v569
    %v592 = vadd.f32 %v540, %v569
    %v593 = vadd.f32 %v543, %v569
    %v594 = vadd.f32 %v546, %v569
    %v595 = vadd.f32 %v549, %v569
    %v596 = vadd.f32 %v552, %v569
    %v597 = vadd.f32 %v555, %v569
    %v598 = vadd.f32 %v558, %v569
    %v599 = vadd.f32 %v561, %v569
    %v600 = vadd.f32 %v564, %v569
    %v601 = vadd.f32 %v567, %v569
    %v634 = vlaneseq
    %v635 = vand.u32 %v634, 127
    %v636 = vlaneseq
    %v637 = vshrl.u32 %v636, 7
    %v638 = vsub.s32 %v635, %v637
    %v639 = vrot.slane %v570, %v638
    %v640 = vadd.s32 %v635, 4294967288
    %v641 = vlaneseq
    %v642 = vshrl.u32 %v641, 7
    %v643 = vsub.s32 %v640, %v642
    %v644 = vrot.slane %v571, %v643
    %vm645 = vcmask 130112
    %v646 = vsel %vm645, %v644, %v639
    %v647 = vadd.s32 %v635, 4294967280
    %v648 = vlaneseq
    %v649 = vshrl.u32 %v648, 7
    %v650 = vsub.s32 %v647, %v649
    %v651 = vrot.slane %v572, %v650
    %vm652 = vcmask 195712
    %v653 = vsel %vm652, %v651, %v646
    %v654 = vadd.s32 %v635, 4294967272
    %v655 = vlaneseq
    %v656 = vshrl.u32 %v655, 7
    %v657 = vsub.s32 %v654, %v656
    %v658 = vrot.slane %v573, %v657
    %vm659 = vcmask 261312
    %v660 = vsel %vm659, %v658, %v653
    %v661 = vadd.s32 %v635, 4294967264
    %v662 = vlaneseq
    %v663 = vshrl.u32 %v662, 7
    %v664 = vsub.s32 %v661, %v663
    %v665 = vrot.slane %v574, %v664
    %vm666 = vcmask 326912
    %v667 = vsel %vm666, %v665, %v660
    %v668 = vadd.s32 %v635, 4294967256
    %v669 = vlaneseq
    %v670 = vshrl.u32 %v669, 7
    %v671 = vsub.s32 %v668, %v670
    %v672 = vrot.slane %v575, %v671
    %vm673 = vcmask 392512
    %v674 = vsel %vm673, %v672, %v667
    %v675 = vadd.s32 %v635, 4294967248
    %v676 = vlaneseq
    %v677 = vshrl.u32 %v676, 7
    %v678 = vsub.s32 %v675, %v677
    %v679 = vrot.slane %v576, %v678
    %vm680 = vcmask 458112
    %v681 = vsel %vm680, %v679, %v674
    %v682 = vadd.s32 %v635, 4294967240
    %v683 = vlaneseq
    %v684 = vshrl.u32 %v683, 7
    %v685 = vsub.s32 %v682, %v684
    %v686 = vrot.slane %v577, %v685
    %vm687 = vcmask 523712
    %v688 = vsel %vm687, %v686, %v681
    %v689 = vadd.s32 %v635, 4294967232
    %v690 = vlaneseq
    %v691 = vshrl.u32 %v690, 7
    %v692 = vsub.s32 %v689, %v691
    %v693 = vrot.slane %v578, %v692
    %vm694 = vcmask 589312
    %v695 = vsel %vm694, %v693, %v688
    %v696 = vadd.s32 %v635, 4294967224
    %v697 = vlaneseq
    %v698 = vshrl.u32 %v697, 7
    %v699 = vsub.s32 %v696, %v698
    %v700 = vrot.slane %v579, %v699
    %vm701 = vcmask 654912
    %v702 = vsel %vm701, %v700, %v695
    %v703 = vadd.s32 %v635, 4294967216
    %v704 = vlaneseq
    %v705 = vshrl.u32 %v704, 7
    %v706 = vsub.s32 %v703, %v705
    %v707 = vrot.slane %v580, %v706
    %vm708 = vcmask 720512
    %v709 = vsel %vm708, %v707, %v702
    %v710 = vadd.s32 %v635, 4294967208
    %v711 = vlaneseq
    %v712 = vshrl.u32 %v711, 7
    %v713 = vsub.s32 %v710, %v712
    %v714 = vrot.slane %v581, %v713
    %vm715 = vcmask 786112
    %v716 = vsel %vm715, %v714, %v709
    %v717 = vadd.s32 %v635, 4294967200
    %v718 = vlaneseq
    %v719 = vshrl.u32 %v718, 7
    %v720 = vsub.s32 %v717, %v719
    %v721 = vrot.slane %v582, %v720
    %vm722 = vcmask 851712
    %v723 = vsel %vm722, %v721, %v716
    %v724 = vadd.s32 %v635, 4294967192
    %v725 = vlaneseq
    %v726 = vshrl.u32 %v725, 7
    %v727 = vsub.s32 %v724, %v726
    %v728 = vrot.slane %v583, %v727
    %vm729 = vcmask 917312
    %v730 = vsel %vm729, %v728, %v723
    %v731 = vadd.s32 %v635, 4294967184
    %v732 = vlaneseq
    %v733 = vshrl.u32 %v732, 7
    %v734 = vsub.s32 %v731, %v733
    %v735 = vrot.slane %v584, %v734
    %vm736 = vcmask 982912
    %v737 = vsel %vm736, %v735, %v730
    %v738 = vadd.s32 %v635, 4294967176
    %v739 = vlaneseq
    %v740 = vshrl.u32 %v739, 7
    %v741 = vsub.s32 %v738, %v740
    %v742 = vrot.slane %v585, %v741
    %vm743 = vcmask 1048512
    %v744 = vsel %vm743, %v742, %v737
    %v745 = vlaneseq
    %v746 = vshrl.u32 %v745, 7
    %v747 = vsub.s32 %v635, %v746
    %v748 = vrot.slane %v586, %v747
    %v749 = vlaneseq
    %v750 = vshrl.u32 %v749, 7
    %v751 = vsub.s32 %v640, %v750
    %v752 = vrot.slane %v587, %v751
    %v753 = vsel %vm645, %v752, %v748
    %v754 = vlaneseq
    %v755 = vshrl.u32 %v754, 7
    %v756 = vsub.s32 %v647, %v755
    %v757 = vrot.slane %v588, %v756
    %v758 = vsel %vm652, %v757, %v753
    %v759 = vlaneseq
    %v760 = vshrl.u32 %v759, 7
    %v761 = vsub.s32 %v654, %v760
    %v762 = vrot.slane %v589, %v761
    %v763 = vsel %vm659, %v762, %v758
    %v764 = vlaneseq
    %v765 = vshrl.u32 %v764, 7
    %v766 = vsub.s32 %v661, %v765
    %v767 = vrot.slane %v590, %v766
    %v768 = vsel %vm666, %v767, %v763
    %v769 = vlaneseq
    %v770 = vshrl.u32 %v769, 7
    %v771 = vsub.s32 %v668, %v770
    %v772 = vrot.slane %v591, %v771
    %v773 = vsel %vm673, %v772, %v768
    %v774 = vlaneseq
    %v775 = vshrl.u32 %v774, 7
    %v776 = vsub.s32 %v675, %v775
    %v777 = vrot.slane %v592, %v776
    %v778 = vsel %vm680, %v777, %v773
    %v779 = vlaneseq
    %v780 = vshrl.u32 %v779, 7
    %v781 = vsub.s32 %v682, %v780
    %v782 = vrot.slane %v593, %v781
    %v783 = vsel %vm687, %v782, %v778
    %v784 = vlaneseq
    %v785 = vshrl.u32 %v784, 7
    %v786 = vsub.s32 %v689, %v785
    %v787 = vrot.slane %v594, %v786
    %v788 = vsel %vm694, %v787, %v783
    %v789 = vlaneseq
    %v790 = vshrl.u32 %v789, 7
    %v791 = vsub.s32 %v696, %v790
    %v792 = vrot.slane %v595, %v791
    %v793 = vsel %vm701, %v792, %v788
    %v794 = vlaneseq
    %v795 = vshrl.u32 %v794, 7
    %v796 = vsub.s32 %v703, %v795
    %v797 = vrot.slane %v596, %v796
    %v798 = vsel %vm708, %v797, %v793
    %v799 = vlaneseq
    %v800 = vshrl.u32 %v799, 7
    %v801 = vsub.s32 %v710, %v800
    %v802 = vrot.slane %v597, %v801
    %v803 = vsel %vm715, %v802, %v798
    %v804 = vlaneseq
    %v805 = vshrl.u32 %v804, 7
    %v806 = vsub.s32 %v717, %v805
    %v807 = vrot.slane %v598, %v806
    %v808 = vsel %vm722, %v807, %v803
    %v809 = vlaneseq
    %v810 = vshrl.u32 %v809, 7
    %v811 = vsub.s32 %v724, %v810
    %v812 = vrot.slane %v599, %v811
    %v813 = vsel %vm729, %v812, %v808
    %v814 = vlaneseq
    %v815 = vshrl.u32 %v814, 7
    %v816 = vsub.s32 %v731, %v815
    %v817 = vrot.slane %v600, %v816
    %v818 = vsel %vm736, %v817, %v813
    %v819 = vlaneseq
    %v820 = vshrl.u32 %v819, 7
    %v821 = vsub.s32 %v738, %v820
    %v822 = vrot.slane %v601, %v821
    %v823 = vsel %vm743, %v822, %v818
    %vm824 = vcmask 1041409
    %v825 = vsel %vm824, %v823, %v744
    %827 = vst [vmem:[#allocation8] sm:$0x3] %v825
    %s828 = smul.u32 0, 128
    %v829 = vstv %s828
    %v830 = vadd.s32 %v635, %v829
    %vm831 = vcmp.lt.s32.totalorder %v830, 8
    %v832 = vsel %vm831, %v825, -inf
    %v833 = vld [vmem:[#allocation2] sm:$0x3]
    %vm834 = vcmask 1041408
    %v835 = vsel %vm834, %v832, -inf
    %836 = vmax.xlane.f32.xlu0 %v835
    %v837 = vpop.xlane.xlu0 %836
    %v838 = vmax.f32 %v833, %v837
    %v839 = vsub.f32 %v833, %v838
    %v840 = vmul.f32 %v839, 1.442695
    %v841 = vpow.pop %v840
    %843 = vset.pattern.permute.xlu0 0
    %844 = vperm.xlu0 %843, %v838
    %v845 = vpop.permute.xlu0 %844
    %v847 = vsub.f32 %v832, %v845
    %v848 = vmul.f32 %v847, 1.442695
    %v849 = vpow.pop %v848
    %v850 = vld [vmem:[#allocation3] sm:$0x3]
    %v851 = vmul.f32 %v841, %v850
    %v852 = vsel %vm834, %v849, 0.0
    %853 = vadd.xlane.f32.xlu0 %v852
    %v854 = vpop.xlane.xlu0 %853
    %v855 = vadd.f32 %v851, %v854
    %vm856 = vcmask 1024
    %857 = vst.msk [vmem:[#allocation3] sm:$0x3] %vm856, %v855
    %v858 = vld [vmem:[#allocation4] sm:$0x3]
    %860 = vset.pattern.permute.xlu0 0
    %861 = vperm.xlu0 %860, %v841
    %v862 = vpop.permute.xlu0 %861
    %v864 = vmul.f32 %v862, %v858
    %v865 = vlaneseq
    %v866 = vshrl.u32 %v865, 7
    %v867 = vsub.s32 0, %v866
    %v868 = vrot.slane %v849, %v867
    %870 = vbcast.lane.b32.xlu0 %v868, 256
    %v871 = vpop.permute.xlu0 %870
    %s873 = sor.u32 256, 8
    %874 = vbcast.lane.b32.xlu0 %v868, %s873
    %v875 = vpop.permute.xlu0 %874
    %s877 = sor.u32 256, 16
    %878 = vbcast.lane.b32.xlu0 %v868, %s877
    %v879 = vpop.permute.xlu0 %878
    %s881 = sor.u32 256, 24
    %882 = vbcast.lane.b32.xlu0 %v868, %s881
    %v883 = vpop.permute.xlu0 %882
    %s885 = sor.u32 256, 32
    %886 = vbcast.lane.b32.xlu0 %v868, %s885
    %v887 = vpop.permute.xlu0 %886
    %s889 = sor.u32 256, 40
    %890 = vbcast.lane.b32.xlu0 %v868, %s889
    %v891 = vpop.permute.xlu0 %890
    %s893 = sor.u32 256, 48
    %894 = vbcast.lane.b32.xlu0 %v868, %s893
    %v895 = vpop.permute.xlu0 %894
    %s897 = sor.u32 256, 56
    %898 = vbcast.lane.b32.xlu0 %v868, %s897
    %v899 = vpop.permute.xlu0 %898
    %s901 = sor.u32 256, 64
    %902 = vbcast.lane.b32.xlu0 %v868, %s901
    %v903 = vpop.permute.xlu0 %902
    %s905 = sor.u32 256, 72
    %906 = vbcast.lane.b32.xlu0 %v868, %s905
    %v907 = vpop.permute.xlu0 %906
    %s909 = sor.u32 256, 80
    %910 = vbcast.lane.b32.xlu0 %v868, %s909
    %v911 = vpop.permute.xlu0 %910
    %s913 = sor.u32 256, 88
    %914 = vbcast.lane.b32.xlu0 %v868, %s913
    %v915 = vpop.permute.xlu0 %914
    %s917 = sor.u32 256, 96
    %918 = vbcast.lane.b32.xlu0 %v868, %s917
    %v919 = vpop.permute.xlu0 %918
    %s921 = sor.u32 256, 104
    %922 = vbcast.lane.b32.xlu0 %v868, %s921
    %v923 = vpop.permute.xlu0 %922
    %s925 = sor.u32 256, 112
    %926 = vbcast.lane.b32.xlu0 %v868, %s925
    %v927 = vpop.permute.xlu0 %926
    %s929 = sor.u32 256, 120
    %930 = vbcast.lane.b32.xlu0 %v868, %s929
    %v931 = vpop.permute.xlu0 %930
    %v932 = vlaneseq
    %v933 = vshrl.u32 %v932, 7
    %v934 = vsub.s32 1, %v933
    %v935 = vrot.slane %v849, %v934
    %937 = vbcast.lane.b32.xlu0 %v935, 256
    %v938 = vpop.permute.xlu0 %937
    %s940 = sor.u32 256, 8
    %941 = vbcast.lane.b32.xlu0 %v935, %s940
    %v942 = vpop.permute.xlu0 %941
    %s944 = sor.u32 256, 16
    %945 = vbcast.lane.b32.xlu0 %v935, %s944
    %v946 = vpop.permute.xlu0 %945
    %s948 = sor.u32 256, 24
    %949 = vbcast.lane.b32.xlu0 %v935, %s948
    %v950 = vpop.permute.xlu0 %949
    %s952 = sor.u32 256, 32
    %953 = vbcast.lane.b32.xlu0 %v935, %s952
    %v954 = vpop.permute.xlu0 %953
    %s956 = sor.u32 256, 40
    %957 = vbcast.lane.b32.xlu0 %v935, %s956
    %v958 = vpop.permute.xlu0 %957
    %s960 = sor.u32 256, 48
    %961 = vbcast.lane.b32.xlu0 %v935, %s960
    %v962 = vpop.permute.xlu0 %961
    %s964 = sor.u32 256, 56
    %965 = vbcast.lane.b32.xlu0 %v935, %s964
    %v966 = vpop.permute.xlu0 %965
    %s968 = sor.u32 256, 64
    %969 = vbcast.lane.b32.xlu0 %v935, %s968
    %v970 = vpop.permute.xlu0 %969
    %s972 = sor.u32 256, 72
    %973 = vbcast.lane.b32.xlu0 %v935, %s972
    %v974 = vpop.permute.xlu0 %973
    %s976 = sor.u32 256, 80
    %977 = vbcast.lane.b32.xlu0 %v935, %s976
    %v978 = vpop.permute.xlu0 %977
    %s980 = sor.u32 256, 88
    %981 = vbcast.lane.b32.xlu0 %v935, %s980
    %v982 = vpop.permute.xlu0 %981
    %s984 = sor.u32 256, 96
    %985 = vbcast.lane.b32.xlu0 %v935, %s984
    %v986 = vpop.permute.xlu0 %985
    %s988 = sor.u32 256, 104
    %989 = vbcast.lane.b32.xlu0 %v935, %s988
    %v990 = vpop.permute.xlu0 %989
    %s992 = sor.u32 256, 112
    %993 = vbcast.lane.b32.xlu0 %v935, %s992
    %v994 = vpop.permute.xlu0 %993
    %s996 = sor.u32 256, 120
    %997 = vbcast.lane.b32.xlu0 %v935, %s996
    %v998 = vpop.permute.xlu0 %997
    %v999 = vmul.f32 %v34, %v871
    %v1000 = vmul.f32 %v35, %v875
    %v1001 = vmul.f32 %v36, %v879
    %v1002 = vmul.f32 %v37, %v883
    %v1003 = vmul.f32 %v38, %v887
    %v1004 = vmul.f32 %v39, %v891
    %v1005 = vmul.f32 %v40, %v895
    %v1006 = vmul.f32 %v41, %v899
    %v1007 = vmul.f32 %v42, %v903
    %v1008 = vmul.f32 %v43, %v907
    %v1009 = vmul.f32 %v44, %v911
    %v1010 = vmul.f32 %v45, %v915
    %v1011 = vmul.f32 %v46, %v919
    %v1012 = vmul.f32 %v47, %v923
    %v1013 = vmul.f32 %v48, %v927
    %v1014 = vmul.f32 %v49, %v931
    %v1015 = vmul.f32 %v50, %v938
    %v1016 = vmul.f32 %v51, %v942
    %v1017 = vmul.f32 %v52, %v946
    %v1018 = vmul.f32 %v53, %v950
    %v1019 = vmul.f32 %v54, %v954
    %v1020 = vmul.f32 %v55, %v958
    %v1021 = vmul.f32 %v56, %v962
    %v1022 = vmul.f32 %v57, %v966
    %v1023 = vmul.f32 %v58, %v970
    %v1024 = vmul.f32 %v59, %v974
    %v1025 = vmul.f32 %v60, %v978
    %v1026 = vmul.f32 %v61, %v982
    %v1027 = vmul.f32 %v62, %v986
    %v1028 = vmul.f32 %v63, %v990
    %v1029 = vmul.f32 %v64, %v994
    %v1030 = vmul.f32 %v65, %v998
    %v1031 = vsel %vm74, %v999, 0.0
    %v1032 = vsel %vm74, %v1000, 0.0
    %v1033 = vadd.f32 %v1031, %v1032
    %v1034 = vsel %vm74, %v1001, 0.0
    %v1035 = vadd.f32 %v1033, %v1034
    %v1036 = vsel %vm74, %v1002, 0.0
    %v1037 = vadd.f32 %v1035, %v1036
    %v1038 = vsel %vm74, %v1003, 0.0
    %v1039 = vadd.f32 %v1037, %v1038
    %v1040 = vsel %vm74, %v1004, 0.0
    %v1041 = vadd.f32 %v1039, %v1040
    %v1042 = vsel %vm74, %v1005, 0.0
    %v1043 = vadd.f32 %v1041, %v1042
    %v1044 = vsel %vm74, %v1006, 0.0
    %v1045 = vadd.f32 %v1043, %v1044
    %v1046 = vsel %vm74, %v1007, 0.0
    %v1047 = vadd.f32 %v1045, %v1046
    %v1048 = vsel %vm74, %v1008, 0.0
    %v1049 = vadd.f32 %v1047, %v1048
    %v1050 = vsel %vm74, %v1009, 0.0
    %v1051 = vadd.f32 %v1049, %v1050
    %v1052 = vsel %vm74, %v1010, 0.0
    %v1053 = vadd.f32 %v1051, %v1052
    %v1054 = vsel %vm74, %v1011, 0.0
    %v1055 = vadd.f32 %v1053, %v1054
    %v1056 = vsel %vm74, %v1012, 0.0
    %v1057 = vadd.f32 %v1055, %v1056
    %v1058 = vsel %vm74, %v1013, 0.0
    %v1059 = vadd.f32 %v1057, %v1058
    %v1060 = vsel %vm74, %v1014, 0.0
    %v1061 = vadd.f32 %v1059, %v1060
    %v1062 = vrot.slane %v1061, 4
    %v1063 = vadd.f32 %v1061, %v1062
    %v1064 = vrot.slane %v1063, 2
    %v1065 = vadd.f32 %v1063, %v1064
    %v1066 = vrot.slane %v1065, 1
    %v1067 = vadd.f32 %v1065, %v1066
    %v1068 = vsel %vm74, %v1015, 0.0
    %v1069 = vsel %vm74, %v1016, 0.0
    %v1070 = vadd.f32 %v1068, %v1069
    %v1071 = vsel %vm74, %v1017, 0.0
    %v1072 = vadd.f32 %v1070, %v1071
    %v1073 = vsel %vm74, %v1018, 0.0
    %v1074 = vadd.f32 %v1072, %v1073
    %v1075 = vsel %vm74, %v1019, 0.0
    %v1076 = vadd.f32 %v1074, %v1075
    %v1077 = vsel %vm74, %v1020, 0.0
    %v1078 = vadd.f32 %v1076, %v1077
    %v1079 = vsel %vm74, %v1021, 0.0
    %v1080 = vadd.f32 %v1078, %v1079
    %v1081 = vsel %vm74, %v1022, 0.0
    %v1082 = vadd.f32 %v1080, %v1081
    %v1083 = vsel %vm74, %v1023, 0.0
    %v1084 = vadd.f32 %v1082, %v1083
    %v1085 = vsel %vm74, %v1024, 0.0
    %v1086 = vadd.f32 %v1084, %v1085
    %v1087 = vsel %vm74, %v1025, 0.0
    %v1088 = vadd.f32 %v1086, %v1087
    %v1089 = vsel %vm74, %v1026, 0.0
    %v1090 = vadd.f32 %v1088, %v1089
    %v1091 = vsel %vm74, %v1027, 0.0
    %v1092 = vadd.f32 %v1090, %v1091
    %v1093 = vsel %vm74, %v1028, 0.0
    %v1094 = vadd.f32 %v1092, %v1093
    %v1095 = vsel %vm74, %v1029, 0.0
    %v1096 = vadd.f32 %v1094, %v1095
    %v1097 = vsel %vm74, %v1030, 0.0
    %v1098 = vadd.f32 %v1096, %v1097
    %v1099 = vrot.slane %v1098, 4
    %v1100 = vadd.f32 %v1098, %v1099
    %v1101 = vrot.slane %v1100, 2
    %v1102 = vadd.f32 %v1100, %v1101
    %v1103 = vrot.slane %v1102, 1
    %v1104 = vadd.f32 %v1102, %v1103
    %v1107 = vsel %vm824, %v1104, %v1067
    %v1109 = vadd.f32 %v864, %v1107
    %vm1110 = vcmask 25600
    %1111 = vst.msk [vmem:[#allocation4] sm:$0x3] %vm1110, %v1109
    %1112 = vst.msk [vmem:[#allocation2] sm:$0x3] %vm856, %v838
    // Predicated region
    $region26: #{tpu_custom_call.1} parent=1 // pred_check
      %p1113 = pneg %p25
    $region27: #{tpu_custom_call.1} parent=1 // pred_check_branch
      %1115 = sbr.rel (%p1113) target = $region29
    $region28: #{tpu_custom_call.1} parent=1 // pred_region
      %v1116 = vld [vmem:[#allocation3] sm:$0x3]
      %v1117 = vrcp.pop %v1116
      %v1118 = vld [vmem:[#allocation4] sm:$0x3]
      %1120 = vset.pattern.permute.xlu0 0
      %1121 = vperm.xlu0 %1120, %v1117
      %v1122 = vpop.permute.xlu0 %1121
      %v1124 = vmul.f32 %v1118, %v1122
      %1125 = vst.msk [vmem:[#allocation6] sm:$0x3] %vm1110, %v1124
    $region29: #{tpu_custom_call.1} parent=1 // pred_fallthru
      _
    // Predicated region
    $region30: #{tpu_custom_call.1} parent=1 // pred_check
      _
    $region31: #{tpu_custom_call.1} parent=1 // pred_check_branch
      %1127 = sbr.rel (0) target = $region33
    $region32: #{tpu_custom_call.1} parent=1 // pred_region
      %s1129 = ssub.s32 32, 32
      %1130 = vsyncadd [#allocation7], %s1129
      %s1132 = sshll.u32 [#allocation6], 4
      %s1133 = int_to_ptr.vmem [resolvable:$true] %s1132
      %1135 = dma.vmem_to_hbm [thread:$0]  %s1133, 32, %s5, [#allocation7]
    $region33: #{tpu_custom_call.1} parent=1 // pred_fallthru
      _
    // Predicated region
    $region34: #{tpu_custom_call.1} parent=1 // pred_check
      _
    $region35: #{tpu_custom_call.1} parent=1 // pred_check_branch
      %1137 = sbr.rel (0) target = $region37
    $region36: #{tpu_custom_call.1} parent=1 // pred_region
      %s1139 = ssub.s32 32, 32
      %1140 = vsyncadd [#allocation9], %s1139
      %s1142 = sshll.u32 [#allocation8], 4
      %s1143 = int_to_ptr.vmem [resolvable:$true] %s1142
      %1145 = dma.vmem_to_hbm [thread:$0]  %s1143, 32, %s6, [#allocation9]
    $region37: #{tpu_custom_call.1} parent=1 // pred_fallthru
      _
    // Predicated region
    $region38: #{tpu_custom_call.1} parent=1 // pred_check
      _
    $region39: #{tpu_custom_call.1} parent=1 // pred_check_branch
      %1147 = sbr.rel (0) target = $region41
    $region40: #{tpu_custom_call.1} parent=1 // pred_region
      %1148 = dma.done [#allocation7], 32
    $region41: #{tpu_custom_call.1} parent=1 // pred_fallthru
      _
    // Predicated region
    $region42: #{tpu_custom_call.1} parent=1 // pred_check
      _
    $region43: #{tpu_custom_call.1} parent=1 // pred_check_branch
      %1150 = sbr.rel (0) target = $region45
    $region44: #{tpu_custom_call.1} parent=1 // pred_region
      %1151 = dma.done [#allocation9], 32
    $region45: #{tpu_custom_call.1} parent=1 // pred_fallthru
      _
    %1152 = vsyncpa [#allocation7], 1
    %1153 = vsyncpa [#allocation9], 1

</llo_original>
